<compile_context>
chip_gen: v7x
topology: tpu7x:2x2x1
jax: 0.10.0
libtpu: 0.0.40
codegen_flags: <defaults>
</compile_context>

<pallas_src>
import jax
import jax.numpy as jnp
import numpy as np
from jax.experimental import pallas as pl
from jax.experimental.pallas import tpu as pltpu

_LANE = 128
_SLAB_ELEMS = (2 * 1024 * 1024) // 4      # ~2 MiB of f32 per (TB, L, TC) slab
_W_BYTES_MAX = 4 * 1024 * 1024            # max size of the resident (L, L) W


def _build_weight(L, kernel_size):
    """(L, L) banded matrix of integer tap counts: W[i, j] = number of taps of
    the length-k replicate-padded window centered at i that land on source row
    j.  Every row sums to kernel_size (handles k > L via clamping)."""
    pad = (kernel_size - 1) // 2
    w = np.zeros((L, L), dtype=np.float32)
    idx = np.arange(L)
    for d in range(-pad, pad + 1):
        src = np.clip(idx + d, 0, L - 1)
        w[idx, src] += 1.0
    return w


def _make_mxu_kernel(TB, kernel_size):
    inv_k = 1.0 / float(kernel_size)

    def kernel(w_ref, x_ref, res_ref, mean_ref):
        w = w_ref[...]                       # (L, L), VMEM-resident (const map)
        for b in range(TB):                  # static unroll; TB is small
            x = x_ref[b]                     # (L, TC)
            acc = jnp.dot(w, x, preferred_element_type=jnp.float32)
            mean = acc * inv_k               # 1/k applied in f32 on the VPU
            mean_ref[b] = mean.astype(mean_ref.dtype)
            res_ref[b] = (x.astype(jnp.float32) - mean).astype(res_ref.dtype)

    return kernel


def _make_roll_kernel(L, TB, kernel_size):
    pad = (kernel_size - 1) // 2
    inv_k = 1.0 / float(kernel_size)

    def kernel(x_ref, res_ref, mean_ref):
        row = jax.lax.broadcasted_iota(jnp.int32, (L, 1), 0)   # slim mask src
        for b in range(TB):
            xf = x_ref[b].astype(jnp.float32)                  # (L, TC)
            first = xf[0:1, :]                                  # (1, TC)
            last = xf[L - 1:L, :]
            acc = xf                                            # center tap
            for d in range(1, pad + 1):
                if d >= L:
                    # Window wider than the sequence: both taps clamp to edges.
                    acc = acc + first + last
                else:
                    # forward tap x[i+d], clamped to x[L-1] past the end
                    acc = acc + jnp.where(row < L - d,
                                          pltpu.roll(xf, L - d, axis=0), last)
                    # backward tap x[i-d], clamped to x[0] before the start
                    acc = acc + jnp.where(row >= d,
                                          pltpu.roll(xf, d, axis=0), first)
            mean = acc * inv_k
            mean_ref[b] = mean.astype(mean_ref.dtype)
            res_ref[b] = (xf - mean).astype(res_ref.dtype)

    return kernel


def _pick_tiles(B, L, C_pad):
    """(TB, TC): TC a lane-dense divisor of C_pad, TB a divisor of B, with the
    (TB, L, TC) block ~2 MiB of f32 (VMEM-safe on v7x's 64 MiB, big enough to
    amortize per-step overhead on v5e/v6e)."""
    max_tc = max(_LANE, (_SLAB_ELEMS // max(L, 1)) // _LANE * _LANE)
    tc = min(C_pad, max_tc)
    while C_pad % tc != 0:
        tc -= _LANE
    c_steps = C_pad // tc
    # Keep >=2 grid steps when the channel grid is trivial so both v7x
    # TensorCores get work (neutral on single-TC v5e/v6e).
    min_b_steps = 2 if (c_steps == 1 and B >= 2) else 1
    per_batch = L * tc
    tb = 1
    for cand in range(B, 0, -1):
        if (B % cand == 0 and cand * per_batch <= _SLAB_ELEMS
                and B // cand >= min_b_steps):
            tb = cand
            break
    return tb, tc


def series_decomp(x, kernel_size, use_mxu=None):
    """x: (B, L, C). Returns (res, moving_mean, x), like the PyTorch module."""
    if kernel_size < 1 or kernel_size % 2 != 1:
        raise ValueError(
            "kernel_size must be a positive odd integer (got "
            f"{kernel_size}); even sizes change the padding semantics of the "
            "original module.")
    B, L, C = x.shape

    # Lane-dense channels: pad C up to a multiple of 128 so output stores are
    # full-width vst instead of masked partial stores; padded lanes are sliced
    # off below (their cost is negligible vs. the store-density win).
    C_pad = -(-C // _LANE) * _LANE
    x_in = x if C_pad == C else jnp.pad(x, ((0, 0), (0, 0), (0, C_pad - C)))

    TB, TC = _pick_tiles(B, L, C_pad)
    grid = (B // TB, C_pad // TC)
    blk = pl.BlockSpec((TB, L, TC), lambda b, c: (b, 0, c))
    out_shape = (jax.ShapeDtypeStruct((B, L, C_pad), x.dtype),   # res
                 jax.ShapeDtypeStruct((B, L, C_pad), x.dtype))   # moving_mean

    if use_mxu is None:
        use_mxu = L * L * jnp.dtype(x.dtype).itemsize <= _W_BYTES_MAX

    if use_mxu:
        # Integer band weights (<= kernel_size) are exactly representable in
        # bf16 for any realistic window, so the bf16 MXU path stays exact;
        # f32 inputs keep an f32 weight matrix.
        w = jnp.asarray(_build_weight(L, kernel_size), dtype=x.dtype)
        kernel = _make_mxu_kernel(TB, kernel_size)
        in_specs = [pl.BlockSpec((L, L), lambda b, c: (0, 0)),   # resident W
                    blk]
        args = (w, x_in)
    else:
        kernel = _make_roll_kernel(L, TB, kernel_size)
        in_specs = [blk]
        args = (x_in,)

    res, mean = pl.pallas_call(
        kernel,
        out_shape=out_shape,
        grid_spec=pltpu.PrefetchScalarGridSpec(
            num_scalar_prefetch=0,
            grid=grid,
            in_specs=in_specs,
            out_specs=[blk, blk],
        ),
        compiler_params=pltpu.CompilerParams(
            dimension_semantics=("parallel", "parallel"),
            vmem_limit_bytes=48 * 1024 * 1024,   # <= v7x's 64 MiB physical
        ),
    )(*args)

    if C_pad != C:
        res = res[:, :, :C]
        mean = mean[:, :, :C]
    return res, mean, x


def _reference(x, kernel_size):
    # Pure-JAX reference of the PyTorch forward, for sanity checking.
    pad = (kernel_size - 1) // 2
    front = jnp.repeat(x[:, 0:1, :], pad, axis=1)
    end = jnp.repeat(x[:, -1:, :], pad, axis=1)
    xp = jnp.concatenate([front, x, end], axis=1)       # (B, L+2p, C)
    L = x.shape[1]
    mean = jnp.mean(
        jnp.stack([xp[:, j:j + L, :] for j in range(kernel_size)], axis=0),
        axis=0)
    return x - mean, mean, x


def _check(x, kernel_size, atol, rtol, **kw):
    res, mean, x_out = series_decomp(x, kernel_size, **kw)
    jax.block_until_ready((res, mean, x_out))
    res_ref, mean_ref, _ = _reference(x.astype(jnp.float32), kernel_size)
    assert jnp.allclose(res.astype(jnp.float32), res_ref, atol=atol, rtol=rtol)
    assert jnp.allclose(mean.astype(jnp.float32), mean_ref, atol=atol, rtol=rtol)
    assert jnp.array_equal(x_out, x)


if __name__ == "__main__":
    key = jax.random.PRNGKey(0)
    k1, k2, k3, k4 = jax.random.split(key, 4)
    kernel_size = 25          # standard Autoformer moving-average window

    # 1) Small ragged channel count (C padded to 128 wrapper-side), MXU path.
    _check(jax.random.normal(k1, (2, 32, 8), dtype=jnp.float32),
           kernel_size, atol=1e-5, rtol=1e-5)

    # 2) Lane-dense wide channels, MXU path.
    _check(jax.random.normal(k2, (2, 32, 1024), dtype=jnp.float32),
           kernel_size, atol=1e-5, rtol=1e-5)

    # 3) Window wider than the sequence + batch-tiled block (TB=2).
    _check(jax.random.normal(k3, (4, 24, 256), dtype=jnp.float32),
           kernel_size, atol=1e-5, rtol=1e-5)

    # 4) bf16 HBM I/O (exact integer-weight bf16 matmul, f32 accumulation).
    _check(jax.random.normal(k4, (2, 64, 128), dtype=jnp.bfloat16),
           5, atol=3e-2, rtol=3e-2)

    # 5) Roll-based fallback (auto-selected only for very long L); force it on
    #    a small shape here so the path is validated too.
    _check(jax.random.normal(k1, (2, 32, 256), dtype=jnp.float32),
           kernel_size, atol=1e-5, rtol=1e-5, use_mxu=False)

    print("KERNEL_OK")
</pallas_src>

<mosaic_0001>
module attributes {stable_mosaic.version = 11 : i64} {
  func.func @kernel(%arg0: i32, %arg1: i32, %arg2: memref<32x32xf32, #tpu.memory_space<vmem>>, %arg3: memref<1x32x128xf32, #tpu.memory_space<vmem>>, %arg4: memref<1x32x128xf32, #tpu.memory_space<vmem>>, %arg5: memref<1x32x128xf32, #tpu.memory_space<vmem>>) attributes {dimension_semantics = [#tpu.dimension_semantics<parallel>, #tpu.dimension_semantics<parallel>], iteration_bounds = array<i64: 2, 1>, scalar_prefetch = 0 : i64, scratch_operands = 0 : i64, tpu.core_type = #tpu.core_type<tc>, window_params = [{pipeline_mode = #tpu.pipeline_mode<synchronous>, transform_indices = @transform_0, window_bounds = array<i64: 32, 32>}, {transform_indices = @transform_1, window_bounds = array<i64: 1, 32, 128>}, {transform_indices = @transform_2, window_bounds = array<i64: 1, 32, 128>}, {transform_indices = @transform_3, window_bounds = array<i64: 1, 32, 128>}]} {
    %c0 = arith.constant 0 : index
    %c0_0 = arith.constant 0 : index
    %0 = vector.load %arg2[%c0, %c0_0] : memref<32x32xf32, #tpu.memory_space<vmem>>, vector<32x32xf32>
    %c0_1 = arith.constant 0 : index
    %c0_2 = arith.constant 0 : index
    %c0_3 = arith.constant 0 : index
    %1 = vector.load %arg3[%c0_1, %c0_2, %c0_3] : memref<1x32x128xf32, #tpu.memory_space<vmem>>, vector<1x32x128xf32>
    %2 = vector.shape_cast %1 : vector<1x32x128xf32> to vector<32x128xf32>
    %cst = arith.constant dense<0.000000e+00> : vector<32x128xf32>
    %3 = tpu.matmul %0, %2, %cst {dimension_numbers = #tpu.dot_dimension_numbers<[1], [0], [0], [1], [0, 0, 1, 1], [], []>} : vector<32x32xf32>, vector<32x128xf32>, vector<32x128xf32> -> vector<32x128xf32>
    %cst_4 = arith.constant 4.000000e-02 : f32
    %4 = vector.broadcast %cst_4 : f32 to vector<32x128xf32>
    %5 = arith.mulf %3, %4 : vector<32x128xf32>
    %c0_5 = arith.constant 0 : index
    %c0_6 = arith.constant 0 : index
    %c0_7 = arith.constant 0 : index
    %6 = vector.load %arg5[%c0_5, %c0_6, %c0_7] : memref<1x32x128xf32, #tpu.memory_space<vmem>>, vector<1x32x128xf32>
    %7 = vector.shape_cast %6 : vector<1x32x128xf32> to vector<32x128xf32>
    %8 = vector.shape_cast %5 : vector<32x128xf32> to vector<1x32x128xf32>
    tpu.vector_store %arg5[%c0_5, %c0_6, %c0_7], %8 {strides = array<i32>} : memref<1x32x128xf32, #tpu.memory_space<vmem>>, vector<1x32x128xf32>,
    %9 = arith.subf %2, %5 : vector<32x128xf32>
    %c0_8 = arith.constant 0 : index
    %c0_9 = arith.constant 0 : index
    %c0_10 = arith.constant 0 : index
    %10 = vector.load %arg4[%c0_8, %c0_9, %c0_10] : memref<1x32x128xf32, #tpu.memory_space<vmem>>, vector<1x32x128xf32>
    %11 = vector.shape_cast %10 : vector<1x32x128xf32> to vector<32x128xf32>
    %12 = vector.shape_cast %9 : vector<32x128xf32> to vector<1x32x128xf32>
    tpu.vector_store %arg4[%c0_8, %c0_9, %c0_10], %12 {strides = array<i32>} : memref<1x32x128xf32, #tpu.memory_space<vmem>>, vector<1x32x128xf32>,
    return
  }
  func.func @transform_0(%arg0: i32, %arg1: i32) -> (i32, i32) {
    %c0_i32 = arith.constant 0 : i32
    %c0_i32_0 = arith.constant 0 : i32
    %c0_i32_1 = arith.constant 0 : i32
    return %c0_i32, %c0_i32_0 : i32, i32
  }
  func.func @transform_1(%arg0: i32, %arg1: i32) -> (i32, i32, i32) {
    %c0_i32 = arith.constant 0 : i32
    %c0_i32_0 = arith.constant 0 : i32
    return %arg0, %c0_i32, %arg1 : i32, i32, i32
  }
  func.func @transform_2(%arg0: i32, %arg1: i32) -> (i32, i32, i32) {
    %c0_i32 = arith.constant 0 : i32
    %c0_i32_0 = arith.constant 0 : i32
    return %arg0, %c0_i32, %arg1 : i32, i32, i32
  }
  func.func @transform_3(%arg0: i32, %arg1: i32) -> (i32, i32, i32) {
    %c0_i32 = arith.constant 0 : i32
    %c0_i32_0 = arith.constant 0 : i32
    return %arg0, %c0_i32, %arg1 : i32, i32, i32
  }
}

</mosaic_0001>

<llo_original>
// kernel: tpu_custom_call.1
$region0: #{tpu_custom_call.1}
  #allocation0 [shape = 'u32[]', space=smem, size = 0x4, offset = 0x4, fixed_abs, tag = 'smem constant byte address 0x4 - core index']
  #allocation1 [shape = 'u32[144,128]{1,0:T(1,128)}', space=vmem, size = 0x12000, scoped, tag = 'internal scratch']
  %s0 = inlined_call_operand.hbm [shape: f32[32,32], index: 0, kind: input, shape index: {}]
  %s1 = inlined_call_operand.hbm [shape: f32[2,32,128], index: 1, kind: input, shape index: {}]
  %s2 = inlined_call_operand.hbm [shape: f32[2,32,128], index: 2, kind: output, shape index: {0}]
  %s3 = inlined_call_operand.hbm [shape: f32[2,32,128], index: 3, kind: output, shape index: {1}]
  %4 = xla_tuple %s2, %s3
  %s5 = sld [smem:[#allocation0]]
  $region57: #{tpu_custom_call.1} parent=0
    _
  %s7 = ssub.s32 1, %s5
  %s8 = scalar_select 0, %s7, %s5
  $region1: #{tpu_custom_call.1} parent=0
    #allocation2 [shape = 'u8[16384]{0}', space=vmem, size = 0x4000, scoped, tag = 'input window, operand 0, single buffered']
    #allocation3 [shape = 's32[2]{0}', space=sflag, size = 0x8, scoped, tag = 'scoped memory for tpu_custom_call.1']
    #allocation4 [shape = 's32[2]{0}', space=sflag, size = 0x8, scoped, tag = 'scoped memory for tpu_custom_call.1']
    #allocation5 [shape = 'u8[32768]{0}', space=vmem, size = 0x8000, scoped, tag = 'input window, operand 1']
    #allocation6 [shape = 's32[2]{0}', space=sflag, size = 0x8, scoped, tag = 'scoped memory for tpu_custom_call.1']
    #allocation7 [shape = 'u8[32768]{0}', space=vmem, size = 0x8000, scoped, tag = 'output window, operand 0']
    #allocation8 [shape = 'u8[32768]{0}', space=vmem, size = 0x8000, scoped, tag = 'output window, operand 1']
    #allocation9 [shape = 's32[2]{0}', space=sflag, size = 0x8, scoped, tag = 'scoped memory for tpu_custom_call.1']
    %9 = vsyncpa [#allocation3], 0
    %10 = vsyncpa [#allocation6], 0
    %s11 = scalar_lea.sflag [#allocation6], 1
    %12 = vsyncpa %s11, 0
    %13 = vsyncpa [#allocation4], 0
    %s14 = scalar_lea.sflag [#allocation4], 1
    %15 = vsyncpa %s14, 0
    %16 = vsyncpa [#allocation9], 0
    %s17 = scalar_lea.sflag [#allocation9], 1
    %18 = vsyncpa %s17, 0
    loop: start=0, step=1, limit=4
    $region2: #{tpu_custom_call.1} parent=1 // loop_pre_header
      _
    $region3: #{tpu_custom_call.1} parent=1 // loop_header
      %s20 = sphi 0, %s24
      %p21 = scmp.ge.s32.totalorder %s20, 4
      %s27 = sphi 0, %s39
      %s28 = sphi 0, %s35
      %s29 = sphi 0, %s27
      %s30 = sphi 0, %s28
      %s31 = sphi 0, %s29
      %s32 = sphi 0, %s30
      %s40 = sphi 0, %s40
      %s42 = sphi 0, %s40
      %s43 = sphi 0, %s42
      %s57 = sphi 0, %s43
      %s65 = sphi 0, %s67
      %s68 = sphi 0, %s65
      %s69 = sphi 0, %s68
      %s85 = sphi 0, %s69
      %s93 = sphi 0, %s95
      %s96 = sphi 0, %s93
      %s97 = sphi 0, %s96
      %s113 = sphi 0, %s97
      %s121 = sphi 0, %s123
      %s124 = sphi 0, %s121
      %s125 = sphi 0, %s124
      %s141 = sphi 0, %s125
    $region4: #{tpu_custom_call.1} parent=1 // loop_header_branch
      %23 = sbr.rel (%p21) target = $region8
    $region5: #{tpu_custom_call.1} parent=1 // loop_body
      %s25 = ssub.s32 %s20, 1
      %s26 = ssub.s32 %s20, 2
      %s33 = sadd.s32 1, %s28
      %p34 = scmp.ge.s32.totalorder %s33, 1
      %s35 = scalar_select %p34, 0, %s33
      %s36 = sadd.s32 1, %s27
      %s37 = scalar_select %p34, %s36, %s27
      %p38 = scmp.ge.s32.totalorder %s37, 2
      %s39 = scalar_select %p38, 0, %s37
      %s41 = sadd.s32 %s40, 1
      %p44 = scmp.eq.s32.totalorder %s20, 1
      %p45 = scmp.ne.s32.totalorder %s40, %s42
      %p46 = scmp.eq.s32.totalorder %s20, 0
      %p47 = por %p45, %p46
      %p48 = scmp.ne.s32.totalorder %s40, %s42
      %p49 = scmp.eq.s32.totalorder %s25, 1
      %p50 = por %p48, %p49
      %p51 = scmp.ne.s32.totalorder %s42, %s43
      %p52 = scmp.eq.s32.totalorder %s25, 0
      %p53 = por %p51, %p52
      %p54 = scmp.ne.s32.totalorder %s42, %s43
      %p55 = scmp.eq.s32.totalorder %s26, 1
      %p56 = por %p54, %p55
      %p58 = scmp.ne.s32.totalorder %s43, %s57
      %p59 = scmp.eq.s32.totalorder %s26, 0
      %p60 = por %p58, %p59
      %s61 = ssub.s32 %s27, %s39
      %s62 = ssub.s32 %s28, %s35
      %s63 = sor.u32 %s61, %s62
      %p64 = scmp.eq.s32.totalorder %s63, 0
      %s66 = sadd.s32 %s65, 1
      %s67 = scalar_select %p64, %s65, %s66
      %p70 = pneg %p64
      %p71 = scmp.eq.s32.totalorder %s20, 1
      %p72 = por %p70, %p71
      %p73 = scmp.ne.s32.totalorder %s65, %s68
      %p74 = scmp.eq.s32.totalorder %s20, 0
      %p75 = por %p73, %p74
      %p76 = scmp.ne.s32.totalorder %s65, %s68
      %p77 = scmp.eq.s32.totalorder %s25, 1
      %p78 = por %p76, %p77
      %p79 = scmp.ne.s32.totalorder %s68, %s69
      %p80 = scmp.eq.s32.totalorder %s25, 0
      %p81 = por %p79, %p80
      %p82 = scmp.ne.s32.totalorder %s68, %s69
      %p83 = scmp.eq.s32.totalorder %s26, 1
      %p84 = por %p82, %p83
      %p86 = scmp.ne.s32.totalorder %s69, %s85
      %p87 = scmp.eq.s32.totalorder %s26, 0
      %p88 = por %p86, %p87
      %s89 = ssub.s32 %s27, %s39
      %s90 = ssub.s32 %s28, %s35
      %s91 = sor.u32 %s89, %s90
      %p92 = scmp.eq.s32.totalorder %s91, 0
      %s94 = sadd.s32 %s93, 1
      %s95 = scalar_select %p92, %s93, %s94
      %p98 = pneg %p92
      %p99 = scmp.eq.s32.totalorder %s20, 1
      %p100 = por %p98, %p99
      %p101 = scmp.ne.s32.totalorder %s93, %s96
      %p102 = scmp.eq.s32.totalorder %s20, 0
      %p103 = por %p101, %p102
      %p104 = scmp.ne.s32.totalorder %s93, %s96
      %p105 = scmp.eq.s32.totalorder %s25, 1
      %p106 = por %p104, %p105
      %p107 = scmp.ne.s32.totalorder %s96, %s97
      %p108 = scmp.eq.s32.totalorder %s25, 0
      %p109 = por %p107, %p108
      %p110 = scmp.ne.s32.totalorder %s96, %s97
      %p111 = scmp.eq.s32.totalorder %s26, 1
      %p112 = por %p110, %p111
      %p114 = scmp.ne.s32.totalorder %s97, %s113
      %p115 = scmp.eq.s32.totalorder %s26, 0
      %p116 = por %p114, %p115
      %s117 = ssub.s32 %s27, %s39
      %s118 = ssub.s32 %s28, %s35
      %s119 = sor.u32 %s117, %s118
      %p120 = scmp.eq.s32.totalorder %s119, 0
      %s122 = sadd.s32 %s121, 1
      %s123 = scalar_select %p120, %s121, %s122
      %p126 = pneg %p120
      %p127 = scmp.eq.s32.totalorder %s20, 1
      %p128 = por %p126, %p127
      %p129 = scmp.ne.s32.totalorder %s121, %s124
      %p130 = scmp.eq.s32.totalorder %s20, 0
      %p131 = por %p129, %p130
      %p132 = scmp.ne.s32.totalorder %s121, %s124
      %p133 = scmp.eq.s32.totalorder %s25, 1
      %p134 = por %p132, %p133
      %p135 = scmp.ne.s32.totalorder %s124, %s125
      %p136 = scmp.eq.s32.totalorder %s25, 0
      %p137 = por %p135, %p136
      %p138 = scmp.ne.s32.totalorder %s124, %s125
      %p139 = scmp.eq.s32.totalorder %s26, 1
      %p140 = por %p138, %p139
      %p142 = scmp.ne.s32.totalorder %s125, %s141
      %p143 = scmp.eq.s32.totalorder %s26, 0
      %p144 = por %p142, %p143
      %p145 = scmp.le.s32.totalorder 1, %s20
      %p146 = scmp.lt.s32.totalorder %s20, 3
      %p147 = pnand %p145, %p146
      %p148 = pneg %p147
      // Predicated region
      $region9: #{tpu_custom_call.1} parent=5 // pred_check
        _
      $region10: #{tpu_custom_call.1} parent=5 // pred_check_branch
        %150 = sbr.rel (%p147) target = $region12
      $region11: #{tpu_custom_call.1} parent=5 // pred_region
        %s151 = ssub.s32 %s20, 1
        // Predicated region
        $region13: #{tpu_custom_call.1} parent=11 // pred_check
          %p152 = pneg %p53
        $region14: #{tpu_custom_call.1} parent=11 // pred_check_branch
          %154 = sbr.rel (%p152) target = $region16
        $region15: #{tpu_custom_call.1} parent=11 // pred_region
          %s156 = ssub.s32 512, 512
          %157 = vsyncadd [#allocation3], %s156
          %s158 = sshll.u32 [#allocation2], 4
          %s159 = int_to_ptr.vmem [resolvable:$true] %s158
          %164 = dma.hbm_to_vmem [thread:$0]  %s0, 512, %s159, [#allocation3], 128, 128, 8
        $region16: #{tpu_custom_call.1} parent=11 // pred_fallthru
          _
      $region12: #{tpu_custom_call.1} parent=5 // pred_fallthru
        _
      %p165 = scmp.lt.s32.totalorder %s20, 2
      // Predicated region
      $region17: #{tpu_custom_call.1} parent=5 // pred_check
        %p166 = pneg %p165
      $region18: #{tpu_custom_call.1} parent=5 // pred_check_branch
        %168 = sbr.rel (%p166) target = $region20
      $region19: #{tpu_custom_call.1} parent=5 // pred_region
        // Predicated region
        $region21: #{tpu_custom_call.1} parent=19 // pred_check
          %p169 = pneg %p75
        $region22: #{tpu_custom_call.1} parent=19 // pred_check_branch
          %171 = sbr.rel (%p169) target = $region24
        $region23: #{tpu_custom_call.1} parent=19 // pred_region
          %s172 = sand.u32 %s65, 1
          %s173 = scalar_lea.sflag [#allocation6], %s172
          %s174 = sand.u32 %s65, 1
          %s175 = smul.addr %s174, 32
          %s176 = scalar_lea.vmem [#allocation5], %s175
          %s178 = ssub.s32 512, 512
          %179 = vsyncadd %s173, %s178
          %s180 = smul.addr %s27, 4
          %s181 = sadd.s32 %s28, %s180
          %s182 = smul.addr %s181, 128
          %s183 = scalar_lea.hbm %s1, %s182
          %s184 = sshll.u32 %s176, 4
          %s185 = int_to_ptr.vmem [resolvable:$true] %s184
          %190 = dma.hbm_to_vmem [thread:$0]  %s183, 512, %s185, %s173, 128, 128, 8
        $region24: #{tpu_custom_call.1} parent=19 // pred_fallthru
          _
      $region20: #{tpu_custom_call.1} parent=5 // pred_fallthru
        _
      %p191 = scmp.le.s32.totalorder 1, %s20
      %p192 = scmp.lt.s32.totalorder %s20, 3
      %p193 = pnand %p191, %p192
      %p194 = pneg %p193
      // Predicated region
      $region25: #{tpu_custom_call.1} parent=5 // pred_check
        _
      $region26: #{tpu_custom_call.1} parent=5 // pred_check_branch
        %196 = sbr.rel (%p193) target = $region28
      $region27: #{tpu_custom_call.1} parent=5 // pred_region
        %s197 = ssub.s32 %s20, 1
        // Predicated region
        $region29: #{tpu_custom_call.1} parent=27 // pred_check
          %p198 = pneg %p53
        $region30: #{tpu_custom_call.1} parent=27 // pred_check_branch
          %200 = sbr.rel (%p198) target = $region32
        $region31: #{tpu_custom_call.1} parent=27 // pred_region
          %201 = dma.done [#allocation3], 512
        $region32: #{tpu_custom_call.1} parent=27 // pred_fallthru
          _
        %s202 = sand.u32 %s68, 1
        %s203 = scalar_lea.sflag [#allocation6], %s202
        %s204 = sand.u32 %s68, 1
        %s205 = smul.addr %s204, 32
        %s206 = scalar_lea.vmem [#allocation5], %s205
        // Predicated region
        $region33: #{tpu_custom_call.1} parent=27 // pred_check
          %p207 = pneg %p81
        $region34: #{tpu_custom_call.1} parent=27 // pred_check_branch
          %209 = sbr.rel (%p207) target = $region36
        $region35: #{tpu_custom_call.1} parent=27 // pred_region
          %210 = dma.done %s203, 512
        $region36: #{tpu_custom_call.1} parent=27 // pred_fallthru
          _
        %p211 = pneg %p53
        %p212 = pneg %p50
        %s213 = sand.u32 %s68, 1
        %s214 = scalar_lea.sflag [#allocation6], %s213
        %s215 = sand.u32 %s68, 1
        %s216 = smul.addr %s215, 32
        %s217 = scalar_lea.vmem [#allocation5], %s216
        %p218 = pneg %p81
        %p219 = pneg %p78
        %p220 = pneg %p109
        %p221 = pneg %p106
        %s222 = sand.u32 %s96, 1
        %s223 = scalar_lea.sflag [#allocation4], %s222
        %s224 = sand.u32 %s96, 1
        %s225 = smul.addr %s224, 32
        %s226 = scalar_lea.vmem [#allocation7], %s225
        %p227 = pneg %p137
        %p228 = pneg %p134
        %s229 = sand.u32 %s124, 1
        %s230 = scalar_lea.sflag [#allocation9], %s229
        %s231 = sand.u32 %s124, 1
        %s232 = smul.addr %s231, 32
        %s233 = scalar_lea.vmem [#allocation8], %s232
        %v234 = vld [vmem:[#allocation2] sm:$0xff]
        %v235 = vld [vmem:[#allocation2 + $0x8] sm:$0xff]
        %v236 = vld [vmem:[#allocation2 + $0x10] sm:$0xff]
        %v237 = vld [vmem:[#allocation2 + $0x18] sm:$0xff]
        %v238 = vld [vmem:[%s206] sm:$0xff]
        %v239 = vld [vmem:[%s206 + $0x8] sm:$0xff]
        %v240 = vld [vmem:[%s206 + $0x10] sm:$0xff]
        %v241 = vld [vmem:[%s206 + $0x18] sm:$0xff]
        %vm242 = vcmask 261120
        %v244 = vsel %vm242, %v234, 0
        %v247 = vsel %vm242, %v235, 0
        %v250 = vsel %vm242, %v236, 0
        %v253 = vsel %vm242, %v237, 0
        %255 = vmatprep.subr.mxu0 0.0
        %256 = vmatpush1.msra.mxu0 %v238
        %257 = vmatprep.subr.mxu0 0.0
        %258 = vmatpush1.msra.mxu0 %v239
        %259 = vmatprep.subr.mxu0 0.0
        %260 = vmatpush1.msra.mxu0 %v240
        %261 = vmatprep.subr.mxu0 0.0
        %262 = vmatpush1.msra.mxu0 %v241
        %263 = vmatprep.subr.mxu0 0.0
        %264 = vmatpush1.msra.mxu0 0.0
        %265 = vmatprep.subr.mxu0 0.0
        %266 = vmatpush1.msra.mxu0 0.0
        %267 = vmatprep.subr.mxu0 0.0
        %268 = vmatpush1.msra.mxu0 0.0
        %269 = vmatprep.subr.mxu0 0.0
        %270 = vmatpush1.msra.mxu0 0.0
        %271 = vmatprep.subr.mxu0 0.0
        %272 = vmatpush1.msra.mxu0 0.0
        %273 = vmatprep.subr.mxu0 0.0
        %274 = vmatpush1.msra.mxu0 0.0
        %275 = vmatprep.subr.mxu0 0.0
        %276 = vmatpush1.msra.mxu0 0.0
        %277 = vmatprep.subr.mxu0 0.0
        %278 = vmatpush1.msra.mxu0 0.0
        %279 = vmatprep.subr.mxu0 0.0
        %280 = vmatpush1.msra.mxu0 0.0
        %281 = vmatprep.subr.mxu0 0.0
        %282 = vmatpush1.msra.mxu0 0.0
        %283 = vmatprep.subr.mxu0 0.0
        %284 = vmatpush1.msra.mxu0 0.0
        %285 = vmatprep.subr.mxu0 0.0
        %286 = vmatpush1.msra.mxu0 0.0
        %287 = vmatprep.subr.mxu0 0.0
        %288 = vmatpush1.msra.mxu0 0.0
        %289 = vmatprep.subr.mxu0 0.0
        %290 = vmatpush1.msra.mxu0 0.0
        %291 = vmatprep.subr.mxu0 0.0
        %292 = vmatpush1.msra.mxu0 0.0
        %293 = vmatprep.subr.mxu0 0.0
        %294 = vmatpush1.msra.mxu0 0.0
        %295 = vmatprep.subr.mxu0 0.0
        %296 = vmatpush1.msra.mxu0 0.0
        %297 = vmatprep.subr.mxu0 0.0
        %298 = vmatpush1.msra.mxu0 0.0
        %299 = vmatprep.subr.mxu0 0.0
        %300 = vmatpush1.msra.mxu0 0.0
        %301 = vmatprep.subr.mxu0 0.0
        %302 = vmatpush1.msra.mxu0 0.0
        %303 = vmatprep.subr.mxu0 0.0
        %304 = vmatpush1.msra.mxu0 0.0
        %305 = vmatprep.subr.mxu0 0.0
        %306 = vmatpush1.msra.mxu0 0.0
        %307 = vmatprep.subr.mxu0 0.0
        %308 = vmatpush1.msra.mxu0 0.0
        %309 = vmatprep.subr.mxu0 0.0
        %310 = vmatpush1.msra.mxu0 0.0
        %311 = vmatprep.subr.mxu0 0.0
        %312 = vmatpush1.msra.mxu0 0.0
        %313 = vmatprep.subr.mxu0 0.0
        %314 = vmatpush1.msra.mxu0 0.0
        %315 = vmatprep.subr.mxu0 0.0
        %316 = vmatpush1.msra.mxu0 0.0
        %317 = vmatprep.subr.mxu0 0.0
        %318 = vmatpush1.msra.mxu0 0.0
        %319 = vmatprep.mubr.f32.mxu0 0.0
        %320 = vmatmul.mubr.f32.gmra.mrb[0].mxu0 %v244
        %v321 = vpop.f32.mrb[0].mxu0
        %v322 = vadd.f32 0.0, %v321
        %v323 = vpop.f32.mrb[0].mxu0
        %324 = vmatprep.mubr.f32.mxu0 0.0
        %325 = vmatmul.mubr.f32.gmra.mrb[0].mxu0 %v247
        %v326 = vpop.f32.mrb[0].mxu0
        %v327 = vadd.f32 0.0, %v326
        %v328 = vpop.f32.mrb[0].mxu0
        %329 = vmatprep.mubr.f32.mxu0 0.0
        %330 = vmatmul.mubr.f32.gmra.mrb[0].mxu0 %v250
        %v331 = vpop.f32.mrb[0].mxu0
        %v332 = vadd.f32 0.0, %v331
        %v333 = vpop.f32.mrb[0].mxu0
        %334 = vmatprep.mubr.f32.mxu0 0.0
        %335 = vmatmul.mubr.f32.gmra.mrb[0].mxu0 %v253
        %v336 = vpop.f32.mrb[0].mxu0
        %v337 = vadd.f32 0.0, %v336
        %v338 = vpop.f32.mrb[0].mxu0
        %339 = vdwg.mxu0
        %v340 = vmul.f32 %v322, 0.04
        %v341 = vmul.f32 %v327, 0.04
        %v342 = vmul.f32 %v332, 0.04
        %v343 = vmul.f32 %v337, 0.04
        %344 = vst [vmem:[%s233] sm:$0xff] %v340
        %345 = vst [vmem:[%s233 + $0x8] sm:$0xff] %v341
        %346 = vst [vmem:[%s233 + $0x10] sm:$0xff] %v342
        %347 = vst [vmem:[%s233 + $0x18] sm:$0xff] %v343
        %v348 = vsub.f32 %v238, %v340
        %v349 = vsub.f32 %v239, %v341
        %v350 = vsub.f32 %v240, %v342
        %v351 = vsub.f32 %v241, %v343
        %352 = vst [vmem:[%s226] sm:$0xff] %v348
        %353 = vst [vmem:[%s226 + $0x8] sm:$0xff] %v349
        %354 = vst [vmem:[%s226 + $0x10] sm:$0xff] %v350
        %355 = vst [vmem:[%s226 + $0x18] sm:$0xff] %v351
        %s356 = sand.u32 %s96, 1
        %s357 = scalar_lea.sflag [#allocation4], %s356
        %s358 = sand.u32 %s96, 1
        %s359 = smul.addr %s358, 32
        %s360 = scalar_lea.vmem [#allocation7], %s359
        %s361 = sand.u32 %s124, 1
        %s362 = scalar_lea.sflag [#allocation9], %s361
        %s363 = sand.u32 %s124, 1
        %s364 = smul.addr %s363, 32
        %s365 = scalar_lea.vmem [#allocation8], %s364
        // Predicated region
        $region37: #{tpu_custom_call.1} parent=27 // pred_check
          %p366 = pneg %p106
        $region38: #{tpu_custom_call.1} parent=27 // pred_check_branch
          %368 = sbr.rel (%p366) target = $region40
        $region39: #{tpu_custom_call.1} parent=27 // pred_region
          %s370 = ssub.s32 512, 512
          %371 = vsyncadd %s357, %s370
          %s372 = smul.addr %s29, 4
          %s373 = sadd.s32 %s30, %s372
          %s374 = smul.addr %s373, 128
          %s375 = scalar_lea.hbm %s2, %s374
          %s376 = sshll.u32 %s360, 4
          %s377 = int_to_ptr.vmem [resolvable:$true] %s376
          %382 = dma.vmem_to_hbm [thread:$0]  %s377, 512, %s375, %s357, 128, 128, 8
        $region40: #{tpu_custom_call.1} parent=27 // pred_fallthru
          _
        // Predicated region
        $region41: #{tpu_custom_call.1} parent=27 // pred_check
          %p383 = pneg %p134
        $region42: #{tpu_custom_call.1} parent=27 // pred_check_branch
          %385 = sbr.rel (%p383) target = $region44
        $region43: #{tpu_custom_call.1} parent=27 // pred_region
          %s387 = ssub.s32 512, 512
          %388 = vsyncadd %s362, %s387
          %s389 = smul.addr %s29, 4
          %s390 = sadd.s32 %s30, %s389
          %s391 = smul.addr %s390, 128
          %s392 = scalar_lea.hbm %s3, %s391
          %s393 = sshll.u32 %s365, 4
          %s394 = int_to_ptr.vmem [resolvable:$true] %s393
          %399 = dma.vmem_to_hbm [thread:$0]  %s394, 512, %s392, %s362, 128, 128, 8
        $region44: #{tpu_custom_call.1} parent=27 // pred_fallthru
          _
      $region28: #{tpu_custom_call.1} parent=5 // pred_fallthru
        _
      %p400 = scmp.le.s32.totalorder 2, %s20
      // Predicated region
      $region45: #{tpu_custom_call.1} parent=5 // pred_check
        %p401 = pneg %p400
      $region46: #{tpu_custom_call.1} parent=5 // pred_check_branch
        %403 = sbr.rel (%p401) target = $region48
      $region47: #{tpu_custom_call.1} parent=5 // pred_region
        %s404 = ssub.s32 %s20, 2
        // Predicated region
        $region49: #{tpu_custom_call.1} parent=47 // pred_check
          %p405 = pneg %p112
        $region50: #{tpu_custom_call.1} parent=47 // pred_check_branch
          %407 = sbr.rel (%p405) target = $region52
        $region51: #{tpu_custom_call.1} parent=47 // pred_region
          %s408 = sand.u32 %s97, 1
          %s409 = scalar_lea.sflag [#allocation4], %s408
          %s410 = sand.u32 %s97, 1
          %s411 = smul.addr %s410, 32
          %s412 = scalar_lea.vmem [#allocation7], %s411
          %413 = dma.done %s409, 512
        $region52: #{tpu_custom_call.1} parent=47 // pred_fallthru
          _
        // Predicated region
        $region53: #{tpu_custom_call.1} parent=47 // pred_check
          %p414 = pneg %p140
        $region54: #{tpu_custom_call.1} parent=47 // pred_check_branch
          %416 = sbr.rel (%p414) target = $region56
        $region55: #{tpu_custom_call.1} parent=47 // pred_region
          %s417 = sand.u32 %s125, 1
          %s418 = scalar_lea.sflag [#allocation9], %s417
          %s419 = sand.u32 %s125, 1
          %s420 = smul.addr %s419, 32
          %s421 = scalar_lea.vmem [#allocation8], %s420
          %422 = dma.done %s418, 512
        $region56: #{tpu_custom_call.1} parent=47 // pred_fallthru
          _
      $region48: #{tpu_custom_call.1} parent=5 // pred_fallthru
        _
    $region6: #{tpu_custom_call.1} parent=1 // loop_footer
      %s24 = sadd.s32 1, %s20
    $region7: #{tpu_custom_call.1} parent=1 // loop_footer_branch
      %19 = sbr.rel target = $region3
    $region8: #{tpu_custom_call.1} parent=1 // loop_exit
      _
    %423 = vsyncpa [#allocation3], 1
    %s424 = scalar_lea.sflag [#allocation3], 1
    %425 = vsyncpa %s424, 1
    %426 = vsyncpa [#allocation6], 1
    %s427 = scalar_lea.sflag [#allocation6], 1
    %428 = vsyncpa %s427, 1
    %429 = vsyncpa [#allocation4], 1
    %s430 = scalar_lea.sflag [#allocation4], 1
    %431 = vsyncpa %s430, 1
    %432 = vsyncpa [#allocation9], 1
    %s433 = scalar_lea.sflag [#allocation9], 1
    %434 = vsyncpa %s433, 1

</llo_original>
